<compile_context>
chip_gen: v6e
topology: v6e:2x2x1
jax: 0.10.0
libtpu: 0.0.40
codegen_flags: <defaults>
</compile_context>

<pallas_src>
import jax
import jax.numpy as jnp
from jax.experimental import pallas as pl
from jax.experimental.pallas import tpu as pltpu

_VMEM_LIMIT = 32 * 1024 * 1024  # safe on v5e/v6e/v7x; blocks here are KB-scale


def _round_up(x, m):
    return ((x + m - 1) // m) * m


# ----------------------------------------------------------------------------
# Kernel 1: chained GLU stages.
#   Each stage: y <- (y @ W)[:, :half] * sigmoid((y @ W)[:, half:]) with W the
#   fused Wh|Wg block-Toeplitz temporal-conv weight.  All intermediates stay
#   resident in VMEM; only the first input / final output touch HBM.
# ----------------------------------------------------------------------------
def _make_glu_chain_kernel(n_stages):
    def kernel(*refs):
        x_ref, o_ref = refs[0], refs[-1]
        y = x_ref[...]
        for s in range(n_stages):
            w = refs[1 + 2 * s][...]
            b = refs[2 + 2 * s][...]
            t = jnp.dot(y, w, preferred_element_type=jnp.float32) + b
            half = t.shape[-1] // 2
            y = t[:, :half] * jax.nn.sigmoid(t[:, half:])
        o_ref[...] = y
    return kernel


def glu_chain(x2, stages, tile_rows=256):
    """x2: (R, Cin_total) f32.  stages: list of dicts with fused 'w', 'b'."""
    R, cin = x2.shape
    cols_out = stages[-1]["w"].shape[1] // 2
    tile = min(tile_rows, _round_up(R, 8))        # rows per block, multiple of 8
    rp = _round_up(R, tile)
    if rp != R:                                   # pad tail tile (sliced off below)
        x2 = jnp.pad(x2, ((0, rp - R), (0, 0)))

    in_specs = [pl.BlockSpec((tile, cin), lambda i: (i, 0))]
    args = [x2]
    for st in stages:
        w, b = st["w"], st["b"]
        in_specs.append(pl.BlockSpec(w.shape, lambda i: (0, 0)))
        in_specs.append(pl.BlockSpec(b.shape, lambda i: (0, 0)))
        args += [w, b]

    out = pl.pallas_call(
        _make_glu_chain_kernel(len(stages)),
        out_shape=jax.ShapeDtypeStruct((rp, cols_out), jnp.float32),
        grid=(rp // tile,),
        in_specs=in_specs,
        out_specs=pl.BlockSpec((tile, cols_out), lambda i: (i, 0)),
        compiler_params=pltpu.CompilerParams(
            dimension_semantics=("parallel",),
            vmem_limit_bytes=_VMEM_LIMIT),
    )(*args)
    return out[:R]


def gated_glu(x, layer):
    """x: (B, N, L, Cin) -> (B, N, Lo, Cout) via one fused GLU matmul."""
    B, N, L, cin = x.shape
    y = glu_chain(x.reshape(B * N, L * cin), [layer])
    return y.reshape(B, N, layer["Lo"], layer["cout"])


# ----------------------------------------------------------------------------
# Kernel 2: GGNN spatial propagation, one GRU step, whole time axis per batch.
#   h_ref/ann_ref : (NT, D)/(NT, Da)   rows ordered (node, time)
#   ain/aout      : (NT, NT)           block-diagonal kron(A, I_T)
#   wm (D,2D), bm (1,2D)               fused in/out message transforms
#   wga (2D,3D), bg (1,3D)             fused message path of gates [r|z|c]
#   wgu_rz (D,2D), wgu_c (D,D)         state path of gates
#   wo (D+Da, D), bo (1,D)             fused output head [h_new|ann] @ wo
# ----------------------------------------------------------------------------
def _ggnn_kernel(h_ref, ann_ref, ain_ref, aout_ref,
                 wm_ref, bm_ref, wga_ref, bg_ref, wgu_rz_ref, wgu_c_ref,
                 wo_ref, bo_ref, o_ref):
    f32 = jnp.float32
    h = h_ref[...]          # (NT, D)
    ann = ann_ref[...]      # (NT, Da)
    a_in = ain_ref[...]     # (NT, NT)
    a_out = aout_ref[...]   # (NT, NT)
    D = h.shape[-1]

    def mm(a, b):
        return jnp.dot(a, b, preferred_element_type=f32)

    hw = mm(h, wm_ref[...]) + bm_ref[...]            # (NT, 2D)  [in | out]
    m_in = mm(a_in, hw[:, :D])                       # (NT, D)
    m_out = mm(a_out, hw[:, D:])                     # (NT, D)
    m = jnp.concatenate([m_in, m_out], axis=-1)      # (NT, 2D)

    gm = mm(m, wga_ref[...]) + bg_ref[...]           # (NT, 3D)  [r | z | c]
    gu = mm(h, wgu_rz_ref[...])                      # (NT, 2D)  [r | z]
    r = jax.nn.sigmoid(gm[:, :D] + gu[:, :D])
    z = jax.nn.sigmoid(gm[:, D:2 * D] + gu[:, D:])
    c = jnp.tanh(gm[:, 2 * D:] + mm(r * h, wgu_c_ref[...]))
    h_new = (1.0 - z) * h + z * c

    ho = jnp.concatenate([h_new, ann], axis=-1)      # (NT, D+Da)
    o_ref[...] = jnp.tanh(mm(ho, wo_ref[...]) + bo_ref[...])


def _kron_eye(Ad, T):
    """(B, N, N) -> (B, N*T, N*T) block-diagonal adjacency (rows (n, t))."""
    B, N, _ = Ad.shape
    eye = jnp.eye(T, dtype=Ad.dtype)
    out = Ad[:, :, None, :, None] * eye[None, None, :, None, :]
    return out.reshape(B, N * T, N * T)


def ggnn_step(h, ann, A_in, A_out, p):
    """h: (B, N, T, D), ann: (B, N, T, Da) -> (B, N, T, D).  Native layout."""
    B, N, T, D = h.shape
    Da = ann.shape[-1]
    NT = N * T
    h2 = h.reshape(B, NT, D)          # free reshape, rows = (node, time)
    a2 = ann.reshape(B, NT, Da)
    ain = _kron_eye(A_in, T)
    aout = _kron_eye(A_out, T)

    out = pl.pallas_call(
        _ggnn_kernel,
        out_shape=jax.ShapeDtypeStruct((B, NT, D), jnp.float32),
        grid=(B,),
        in_specs=[
            pl.BlockSpec((None, NT, D), lambda b: (b, 0, 0)),
            pl.BlockSpec((None, NT, Da), lambda b: (b, 0, 0)),
            pl.BlockSpec((None, NT, NT), lambda b: (b, 0, 0)),
            pl.BlockSpec((None, NT, NT), lambda b: (b, 0, 0)),
            pl.BlockSpec((D, 2 * D), lambda b: (0, 0)),
            pl.BlockSpec((1, 2 * D), lambda b: (0, 0)),
            pl.BlockSpec((2 * D, 3 * D), lambda b: (0, 0)),
            pl.BlockSpec((1, 3 * D), lambda b: (0, 0)),
            pl.BlockSpec((D, 2 * D), lambda b: (0, 0)),
            pl.BlockSpec((D, D), lambda b: (0, 0)),
            pl.BlockSpec((D + Da, D), lambda b: (0, 0)),
            pl.BlockSpec((1, D), lambda b: (0, 0)),
        ],
        out_specs=pl.BlockSpec((None, NT, D), lambda b: (b, 0, 0)),
        compiler_params=pltpu.CompilerParams(
            dimension_semantics=("parallel",),
            vmem_limit_bytes=_VMEM_LIMIT),
    )(h2, a2, ain, aout,
      p["wm"], p["bm"], p["wga"], p["bg"], p["wgu_rz"], p["wgu_c"],
      p["wo"], p["bo"])
    return out.reshape(B, N, T, D)


# ----------------------------------------------------------------------------
# Glue: sparse COO adjacency (B, 2, 3, max_nnz) -> dense (B, N, N) in/out,
# computed as one-hot matmuls (MXU-friendly, duplicates accumulate like
# scatter-add).  rows of the "3" axis = [row_index, col_index, value].
# ----------------------------------------------------------------------------
def sparse_to_dense(A, n_node):
    rows = A[:, :, 0, :].astype(jnp.int32)
    cols = A[:, :, 1, :].astype(jnp.int32)
    vals = A[:, :, 2, :].astype(jnp.float32)
    r1h = jax.nn.one_hot(rows, n_node, dtype=jnp.float32)   # (B, 2, nnz, N)
    c1h = jax.nn.one_hot(cols, n_node, dtype=jnp.float32)   # (B, 2, nnz, N)
    dense = jnp.einsum("bden,bde,bdem->bdnm", r1h, vals, c1h)
    return dense[:, 0], dense[:, 1]


# ----------------------------------------------------------------------------
# Parameter init (deterministic, matches Encoder.__init__ arithmetic).
# GLU weights are packed once into block-Toeplitz fused [Wh|Wg] matrices.
# ----------------------------------------------------------------------------
def _toeplitz_glu_weights(key, L, cin, cout, k, scale=0.02):
    Lo = L - k + 1
    kh, kg = jax.random.split(key)
    wh = (jax.random.normal(kh, (k, cin, cout)) * scale).astype(jnp.float32)
    wg = (jax.random.normal(kg, (k, cin, cout)) * scale).astype(jnp.float32)
    bh = jnp.zeros((cout,), jnp.float32)
    bg = jnp.zeros((cout,), jnp.float32)

    def toep(w3):
        # Wbig[(l,ci),(lo,co)] = w3[l-lo, ci, co] if 0 <= l-lo < k else 0
        cols = [jnp.pad(w3, ((lo, Lo - 1 - lo), (0, 0), (0, 0))) for lo in range(Lo)]
        return jnp.stack(cols, 0).transpose(1, 2, 0, 3).reshape(L * cin, Lo * cout)

    w = jnp.concatenate([toep(wh), toep(wg)], axis=1)                 # (L*cin, 2*Lo*cout)
    b = jnp.concatenate([jnp.tile(bh, Lo), jnp.tile(bg, Lo)])[None]   # (1, 2*Lo*cout)
    return dict(w=w, b=b, L=L, k=k, cin=cin, cout=cout, Lo=Lo)


def init_params(key, state_dim, annotation_dim, L, kernel_size=2, n_blocks=1,
                state_dim_bottleneck=64, annotation_dim_bottleneck=64):
    # TODO(synk): n_blocks > 1 not reconstructed (single ST block, as in the toy config).
    keys = iter(jax.random.split(key, 16))
    Dh, Da = state_dim_bottleneck, annotation_dim_bottleneck

    def nrm(shape):
        return (jax.random.normal(next(keys), shape) * 0.02).astype(jnp.float32)

    params = {}
    # ST block: temporal GLU bottlenecks -> GGNN -> temporal GLU back to state_dim
    params["st_gcnn_s"] = _toeplitz_glu_weights(next(keys), L, state_dim, Dh, kernel_size)
    params["st_gcnn_a"] = _toeplitz_glu_weights(next(keys), L, annotation_dim, Da, kernel_size)
    params["ggnn"] = dict(
        wm=nrm((Dh, 2 * Dh)),          # fused [W_msg_in | W_msg_out]
        bm=jnp.zeros((1, 2 * Dh), jnp.float32),
        wga=nrm((2 * Dh, 3 * Dh)),     # fused message path of gates [r|z|c]
        bg=jnp.zeros((1, 3 * Dh), jnp.float32),
        wgu_rz=nrm((Dh, 2 * Dh)),      # fused state path of [r|z]
        wgu_c=nrm((Dh, Dh)),           # state path of candidate
        wo=nrm((Dh + Da, Dh)),         # fused output head [h_new|ann]
        bo=jnp.zeros((1, Dh), jnp.float32),
    )
    params["st_gcnn_o"] = _toeplitz_glu_weights(
        next(keys), L - (kernel_size - 1), Dh, state_dim, kernel_size)

    # Encoder-level gated CNN pyramid: same L arithmetic as Encoder.__init__
    Lr = L - 2 * n_blocks * (kernel_size - 1)
    k1 = Lr // 2
    params["gcnn1"] = _toeplitz_glu_weights(next(keys), Lr, state_dim, state_dim * 2, k1)
    Lr = Lr - (k1 - 1)
    k2 = Lr // 2
    params["gcnn2"] = _toeplitz_glu_weights(next(keys), Lr, state_dim * 2, state_dim * 4, k2)
    Lr = Lr - (k2 - 1)
    k3 = Lr
    params["gcnn3"] = _toeplitz_glu_weights(next(keys), Lr, state_dim * 4, state_dim * 8, k3)
    return params


# ----------------------------------------------------------------------------
# Encoder.forward
#   prop_state : (B, n_node, L, state_dim)
#   annotation : (B, n_node, L, annotation_dim)
#   A          : (B, 2, 3, max_nnz)
#   output     : (B, n_node, state_dim * 8)   (= 40 when state_dim == 5)
# ----------------------------------------------------------------------------
def encoder_forward(params, prop_state, annotation, A):
    B, N, L, S = prop_state.shape
    A_in, A_out = sparse_to_dense(A, N)

    # ---- ST block: temporal GLUs (one fused matmul each) + GGNN spatial step
    h = gated_glu(prop_state, params["st_gcnn_s"])     # (B, N, L-1, 64)
    a = gated_glu(annotation, params["st_gcnn_a"])     # (B, N, L-1, 64)
    h = ggnn_step(h, a, A_in, A_out, params["ggnn"])   # (B, N, L-1, 64)

    # ---- Fused tail: ST output GLU + (conditionally) the 3-layer pyramid,
    #      all in ONE pallas_call with VMEM-resident intermediates.
    T, D = h.shape[2], h.shape[3]
    stages = [params["st_gcnn_o"]]
    if params["st_gcnn_o"]["Lo"] > 1:                  # == output.shape[2] > 1
        stages += [params["gcnn1"], params["gcnn2"], params["gcnn3"]]
    y = glu_chain(h.reshape(B * N, T * D), stages)     # (B*N, 8*S)

    return y.reshape(B, N, S * 8)                      # view(batchSize, n_node, 40)


if __name__ == "__main__":
    # small, consistent shapes: state_dim must be 5 so that 8*state_dim == 40
    B, N, L, S, AD = 2, 4, 8, 5, 5
    max_nnz = 8

    key = jax.random.PRNGKey(0)
    kp, kx, ka, kr, kc, kv = jax.random.split(key, 6)

    params = init_params(kp, state_dim=S, annotation_dim=AD, L=L)

    prop_state = jax.random.normal(kx, (B, N, L, S), jnp.float32)
    annotation = jax.random.normal(ka, (B, N, L, AD), jnp.float32)
    rows = jax.random.randint(kr, (B, 2, 1, max_nnz), 0, N).astype(jnp.float32)
    cols = jax.random.randint(kc, (B, 2, 1, max_nnz), 0, N).astype(jnp.float32)
    vals = jax.random.uniform(kv, (B, 2, 1, max_nnz), jnp.float32)
    A = jnp.concatenate([rows, cols, vals], axis=2)    # (B, 2, 3, max_nnz)

    out = encoder_forward(params, prop_state, annotation, A)
    out = jax.block_until_ready(out)

    assert out.shape == (B, N, S * 8), out.shape
    assert bool(jnp.all(jnp.isfinite(out)))
    print("KERNEL_OK")
</pallas_src>

<mosaic_0001>
module attributes {stable_mosaic.version = 11 : i64} {
  func.func @kernel(%arg0: i32, %arg1: memref<8x40xf32, #tpu.memory_space<vmem>>, %arg2: memref<40x896xf32, #tpu.memory_space<vmem>>, %arg3: memref<1x896xf32, #tpu.memory_space<vmem>>, %arg4: memref<8x448xf32, #tpu.memory_space<vmem>>) attributes {dimension_semantics = [#tpu.dimension_semantics<parallel>], iteration_bounds = array<i64: 1>, scalar_prefetch = 0 : i64, scratch_operands = 0 : i64, tpu.core_type = #tpu.core_type<tc>, window_params = [{transform_indices = @transform_0, window_bounds = array<i64: 8, 40>}, {pipeline_mode = #tpu.pipeline_mode<synchronous>, transform_indices = @transform_1, window_bounds = array<i64: 40, 896>}, {pipeline_mode = #tpu.pipeline_mode<synchronous>, transform_indices = @transform_2, window_bounds = array<i64: 1, 896>}, {transform_indices = @transform_3, window_bounds = array<i64: 8, 448>}]} {
    %c0 = arith.constant 0 : index
    %c0_0 = arith.constant 0 : index
    %0 = vector.load %arg1[%c0, %c0_0] : memref<8x40xf32, #tpu.memory_space<vmem>>, vector<8x40xf32>
    %c0_1 = arith.constant 0 : index
    %c0_2 = arith.constant 0 : index
    %1 = vector.load %arg2[%c0_1, %c0_2] : memref<40x896xf32, #tpu.memory_space<vmem>>, vector<40x896xf32>
    %c0_3 = arith.constant 0 : index
    %c0_4 = arith.constant 0 : index
    %2 = vector.load %arg3[%c0_3, %c0_4] : memref<1x896xf32, #tpu.memory_space<vmem>>, vector<1x896xf32>
    %cst = arith.constant dense<0.000000e+00> : vector<8x896xf32>
    %3 = tpu.matmul %0, %1, %cst {dimension_numbers = #tpu.dot_dimension_numbers<[1], [0], [0], [1], [0, 0, 1, 1], [], []>} : vector<8x40xf32>, vector<40x896xf32>, vector<8x896xf32> -> vector<8x896xf32>
    %4 = vector.broadcast %2 : vector<1x896xf32> to vector<8x896xf32>
    %5 = arith.addf %3, %4 : vector<8x896xf32>
    %6 = vector.extract_strided_slice %5 {offsets = [0, 0], sizes = [8, 448], strides = [1, 1]} : vector<8x896xf32> to vector<8x448xf32>
    %7 = vector.extract_strided_slice %5 {offsets = [0, 448], sizes = [8, 448], strides = [1, 1]} : vector<8x896xf32> to vector<8x448xf32>
    %8 = arith.negf %7 : vector<8x448xf32>
    %9 = math.exp %8 : vector<8x448xf32>
    %cst_5 = arith.constant 1.000000e+00 : f32
    %10 = vector.broadcast %cst_5 : f32 to vector<8x448xf32>
    %11 = arith.addf %10, %9 : vector<8x448xf32>
    %12 = arith.divf %10, %11 : vector<8x448xf32>
    %13 = arith.mulf %6, %12 : vector<8x448xf32>
    %c0_6 = arith.constant 0 : index
    %c0_7 = arith.constant 0 : index
    %14 = vector.load %arg4[%c0_6, %c0_7] : memref<8x448xf32, #tpu.memory_space<vmem>>, vector<8x448xf32>
    tpu.vector_store %arg4[%c0_6, %c0_7], %13 {strides = array<i32>} : memref<8x448xf32, #tpu.memory_space<vmem>>, vector<8x448xf32>,
    return
  }
  func.func @transform_0(%arg0: i32) -> (i32, i32) {
    %c0_i32 = arith.constant 0 : i32
    %c0_i32_0 = arith.constant 0 : i32
    return %arg0, %c0_i32 : i32, i32
  }
  func.func @transform_1(%arg0: i32) -> (i32, i32) {
    %c0_i32 = arith.constant 0 : i32
    %c0_i32_0 = arith.constant 0 : i32
    %c0_i32_1 = arith.constant 0 : i32
    return %c0_i32, %c0_i32_0 : i32, i32
  }
  func.func @transform_2(%arg0: i32) -> (i32, i32) {
    %c0_i32 = arith.constant 0 : i32
    %c0_i32_0 = arith.constant 0 : i32
    %c0_i32_1 = arith.constant 0 : i32
    return %c0_i32, %c0_i32_0 : i32, i32
  }
  func.func @transform_3(%arg0: i32) -> (i32, i32) {
    %c0_i32 = arith.constant 0 : i32
    %c0_i32_0 = arith.constant 0 : i32
    return %arg0, %c0_i32 : i32, i32
  }
}

</mosaic_0001>

<llo_original>
// kernel: tpu_custom_call.1
$region0: #{tpu_custom_call.1}
  #allocation0 [shape = 'u32[]', space=smem, size = 0x4, offset = 0x4, fixed_abs, tag = 'smem constant byte address 0x4 - core index']
  #allocation1 [shape = 'u32[144,128]{1,0:T(1,128)}', space=vmem, size = 0x12000, scoped, tag = 'internal scratch']
  %s0 = inlined_call_operand.hbm [shape: f32[8,40], index: 0, kind: input, shape index: {}]
  %s1 = inlined_call_operand.hbm [shape: f32[40,896], index: 1, kind: input, shape index: {}]
  %s2 = inlined_call_operand.hbm [shape: f32[1,896], index: 2, kind: input, shape index: {}]
  %s3 = inlined_call_operand.hbm [shape: f32[8,448], index: 3, kind: output, shape index: {}]
  %s4 = sld [smem:[#allocation0]]
  $region34: #{tpu_custom_call.1} parent=0
    _
  %s6 = ssub.s32 1, %s4
  %s7 = scalar_select 0, %s6, %s4
  $region1: #{tpu_custom_call.1} parent=0
    #allocation2 [shape = 'u8[4096]{0}', space=vmem, size = 0x1000, scoped, tag = 'input window, operand 0, single buffered']
    #allocation3 [shape = 's32[1]{0}', space=sflag, size = 0x4, scoped, tag = 'scoped memory for tpu_custom_call.1']
    #allocation4 [shape = 's32[1]{0}', space=sflag, size = 0x4, scoped, tag = 'scoped memory for tpu_custom_call.1']
    #allocation5 [shape = 'u8[143360]{0}', space=vmem, size = 0x23000, scoped, tag = 'input window, operand 1, single buffered']
    #allocation6 [shape = 's32[1]{0}', space=sflag, size = 0x4, scoped, tag = 'scoped memory for tpu_custom_call.1']
    #allocation7 [shape = 'u8[3584]{0}', space=vmem, size = 0x1000, scoped, tag = 'input window, operand 2, single buffered']
    #allocation8 [shape = 'u8[16384]{0}', space=vmem, size = 0x4000, scoped, tag = 'output window, operand 0, single buffered']
    %8 = vsyncpa [#allocation3], 0
    %9 = vsyncpa [#allocation6], 0
    %10 = vsyncpa [#allocation4], 0
    // Predicated region
    $region2: #{tpu_custom_call.1} parent=1 // pred_check
      _
    $region3: #{tpu_custom_call.1} parent=1 // pred_check_branch
      %12 = sbr.rel (0) target = $region5
    $region4: #{tpu_custom_call.1} parent=1 // pred_region
      %s14 = ssub.s32 128, 128
      %15 = vsyncadd [#allocation3], %s14
      %s17 = sshll.u32 [#allocation2], 4
      %s18 = int_to_ptr.vmem [resolvable:$true] %s17
      %20 = dma.hbm_to_vmem [thread:$0]  %s0, 128, %s18, [#allocation3]
    $region5: #{tpu_custom_call.1} parent=1 // pred_fallthru
      _
    // Predicated region
    $region6: #{tpu_custom_call.1} parent=1 // pred_check
      _
    $region7: #{tpu_custom_call.1} parent=1 // pred_check_branch
      %22 = sbr.rel (0) target = $region9
    $region8: #{tpu_custom_call.1} parent=1 // pred_region
      %s24 = ssub.s32 4480, 4480
      %25 = vsyncadd [#allocation6], %s24
      %s26 = sshll.u32 [#allocation5], 4
      %s27 = int_to_ptr.vmem [resolvable:$true] %s26
      %32 = dma.hbm_to_vmem [thread:$0]  %s1, 4480, %s27, [#allocation6], 896, 896, 56
    $region9: #{tpu_custom_call.1} parent=1 // pred_fallthru
      _
    // Predicated region
    $region10: #{tpu_custom_call.1} parent=1 // pred_check
      _
    $region11: #{tpu_custom_call.1} parent=1 // pred_check_branch
      %34 = sbr.rel (0) target = $region13
    $region12: #{tpu_custom_call.1} parent=1 // pred_region
      %s36 = ssub.s32 112, 112
      %37 = vsyncadd [#allocation6], %s36
      %s39 = sshll.u32 [#allocation7], 4
      %s40 = int_to_ptr.vmem [resolvable:$true] %s39
      %42 = dma.hbm_to_vmem [thread:$0]  %s2, 112, %s40, [#allocation6]
    $region13: #{tpu_custom_call.1} parent=1 // pred_fallthru
      _
    // Predicated region
    $region14: #{tpu_custom_call.1} parent=1 // pred_check
      _
    $region15: #{tpu_custom_call.1} parent=1 // pred_check_branch
      %44 = sbr.rel (0) target = $region17
    $region16: #{tpu_custom_call.1} parent=1 // pred_region
      %45 = dma.done [#allocation3], 128
    $region17: #{tpu_custom_call.1} parent=1 // pred_fallthru
      _
    // Predicated region
    $region18: #{tpu_custom_call.1} parent=1 // pred_check
      _
    $region19: #{tpu_custom_call.1} parent=1 // pred_check_branch
      %47 = sbr.rel (0) target = $region21
    $region20: #{tpu_custom_call.1} parent=1 // pred_region
      %48 = dma.done [#allocation6], 4480
    $region21: #{tpu_custom_call.1} parent=1 // pred_fallthru
      _
    // Predicated region
    $region22: #{tpu_custom_call.1} parent=1 // pred_check
      _
    $region23: #{tpu_custom_call.1} parent=1 // pred_check_branch
      %50 = sbr.rel (0) target = $region25
    $region24: #{tpu_custom_call.1} parent=1 // pred_region
      %51 = dma.done [#allocation6], 112
    $region25: #{tpu_custom_call.1} parent=1 // pred_fallthru
      _
    %v52 = vld [vmem:[#allocation2] sm:$0xff]
    %v53 = vld [vmem:[#allocation5] sm:$0xff]
    %v54 = vld [vmem:[#allocation5 + $0x8] sm:$0xff]
    %v55 = vld [vmem:[#allocation5 + $0x10] sm:$0xff]
    %v56 = vld [vmem:[#allocation5 + $0x18] sm:$0xff]
    %v57 = vld [vmem:[#allocation5 + $0x20] sm:$0xff]
    %v58 = vld [vmem:[#allocation5 + $0x28] sm:$0xff]
    %v59 = vld [vmem:[#allocation5 + $0x30] sm:$0xff]
    %v60 = vld [vmem:[#allocation5 + $0x38] sm:$0xff]
    %v61 = vld [vmem:[#allocation5 + $0x40] sm:$0xff]
    %v62 = vld [vmem:[#allocation5 + $0x48] sm:$0xff]
    %v63 = vld [vmem:[#allocation5 + $0x50] sm:$0xff]
    %v64 = vld [vmem:[#allocation5 + $0x58] sm:$0xff]
    %v65 = vld [vmem:[#allocation5 + $0x60] sm:$0xff]
    %v66 = vld [vmem:[#allocation5 + $0x68] sm:$0xff]
    %v67 = vld [vmem:[#allocation5 + $0x70] sm:$0xff]
    %v68 = vld [vmem:[#allocation5 + $0x78] sm:$0xff]
    %v69 = vld [vmem:[#allocation5 + $0x80] sm:$0xff]
    %v70 = vld [vmem:[#allocation5 + $0x88] sm:$0xff]
    %v71 = vld [vmem:[#allocation5 + $0x90] sm:$0xff]
    %v72 = vld [vmem:[#allocation5 + $0x98] sm:$0xff]
    %v73 = vld [vmem:[#allocation5 + $0xa0] sm:$0xff]
    %v74 = vld [vmem:[#allocation5 + $0xa8] sm:$0xff]
    %v75 = vld [vmem:[#allocation5 + $0xb0] sm:$0xff]
    %v76 = vld [vmem:[#allocation5 + $0xb8] sm:$0xff]
    %v77 = vld [vmem:[#allocation5 + $0xc0] sm:$0xff]
    %v78 = vld [vmem:[#allocation5 + $0xc8] sm:$0xff]
    %v79 = vld [vmem:[#allocation5 + $0xd0] sm:$0xff]
    %v80 = vld [vmem:[#allocation5 + $0xd8] sm:$0xff]
    %v81 = vld [vmem:[#allocation5 + $0xe0] sm:$0xff]
    %v82 = vld [vmem:[#allocation5 + $0xe8] sm:$0xff]
    %v83 = vld [vmem:[#allocation5 + $0xf0] sm:$0xff]
    %v84 = vld [vmem:[#allocation5 + $0xf8] sm:$0xff]
    %v85 = vld [vmem:[#allocation5 + $0x100] sm:$0xff]
    %v86 = vld [vmem:[#allocation5 + $0x108] sm:$0xff]
    %v87 = vld [vmem:[#allocation5 + $0x110] sm:$0xff]
    %v88 = vld [vmem:[#allocation7] sm:$0xff]
    %v90 = vlaneseq
    %v91 = vshrl.u32 %v90, 7
    %v92 = vsub.s32 0, %v91
    %v93 = vrot.slane %v88, %v92
    %v94 = vlaneseq
    %v95 = vshrl.u32 %v94, 7
    %v96 = vsub.s32 1, %v95
    %v97 = vrot.slane %v88, %v96
    %v98 = vlaneseq
    %v99 = vshrl.u32 %v98, 7
    %v100 = vsub.s32 2, %v99
    %v101 = vrot.slane %v88, %v100
    %v102 = vlaneseq
    %v103 = vshrl.u32 %v102, 7
    %v104 = vsub.s32 3, %v103
    %v105 = vrot.slane %v88, %v104
    %v106 = vlaneseq
    %v107 = vshrl.u32 %v106, 7
    %v108 = vsub.s32 4, %v107
    %v109 = vrot.slane %v88, %v108
    %v110 = vlaneseq
    %v111 = vshrl.u32 %v110, 7
    %v112 = vsub.s32 5, %v111
    %v113 = vrot.slane %v88, %v112
    %v114 = vlaneseq
    %v115 = vshrl.u32 %v114, 7
    %v116 = vsub.s32 6, %v115
    %v117 = vrot.slane %v88, %v116
    %vm125 = vcmask 326656
    %v127 = vsel %vm125, %v52, 0
    %129 = vmatprep.subr.mxu0 0.0
    %130 = vmatpush1.msra.mxu0 0.0
    %131 = vmatprep.subr.mxu0 0.0
    %132 = vmatpush1.msra.mxu0 0.0
    %133 = vmatprep.subr.mxu0 0.0
    %134 = vmatpush1.msra.mxu0 0.0
    %135 = vmatprep.subr.mxu0 0.0
    %136 = vmatpush1.msra.mxu0 0.0
    %137 = vmatprep.subr.mxu0 0.0
    %138 = vmatpush1.msra.mxu0 0.0
    %139 = vmatprep.subr.mxu0 0.0
    %140 = vmatpush1.msra.mxu0 0.0
    %141 = vmatprep.subr.mxu0 0.0
    %142 = vmatpush1.msra.mxu0 0.0
    %143 = vmatprep.subr.mxu0 0.0
    %144 = vmatpush1.msra.mxu0 0.0
    %145 = vmatprep.subr.mxu0 0.0
    %146 = vmatpush1.msra.mxu0 0.0
    %147 = vmatprep.subr.mxu0 0.0
    %148 = vmatpush1.msra.mxu0 0.0
    %149 = vmatprep.subr.mxu0 0.0
    %150 = vmatpush1.msra.mxu0 0.0
    %151 = vmatprep.subr.mxu0 %v82
    %152 = vmatpush1.msra.mxu0 %v81
    %153 = vmatprep.subr.mxu0 %v75
    %154 = vmatpush1.msra.mxu0 %v74
    %155 = vmatprep.subr.mxu0 %v68
    %156 = vmatpush1.msra.mxu0 %v67
    %157 = vmatprep.subr.mxu0 %v61
    %158 = vmatpush1.msra.mxu0 %v60
    %159 = vmatprep.subr.mxu0 %v54
    %160 = vmatpush1.msra.mxu0 %v53
    %161 = vmatprep.subr.mxu0 0.0
    %162 = vmatpush2.msra.mxu0 0.0
    %163 = vmatprep.subr.mxu0 0.0
    %164 = vmatpush2.msra.mxu0 0.0
    %165 = vmatprep.subr.mxu0 0.0
    %166 = vmatpush2.msra.mxu0 0.0
    %167 = vmatprep.subr.mxu0 0.0
    %168 = vmatpush2.msra.mxu0 0.0
    %169 = vmatprep.subr.mxu0 0.0
    %170 = vmatpush2.msra.mxu0 0.0
    %171 = vmatprep.subr.mxu0 0.0
    %172 = vmatpush2.msra.mxu0 0.0
    %173 = vmatprep.subr.mxu0 0.0
    %174 = vmatpush2.msra.mxu0 0.0
    %175 = vmatprep.subr.mxu0 0.0
    %176 = vmatpush2.msra.mxu0 0.0
    %177 = vmatprep.subr.mxu0 0.0
    %178 = vmatpush2.msra.mxu0 0.0
    %179 = vmatprep.subr.mxu0 0.0
    %180 = vmatpush2.msra.mxu0 0.0
    %181 = vmatprep.subr.mxu0 0.0
    %182 = vmatpush2.msra.mxu0 0.0
    %183 = vmatprep.subr.mxu0 0.0
    %184 = vmatpush2.msra.mxu0 0.0
    %185 = vmatprep.subr.mxu0 0.0
    %186 = vmatpush2.msra.mxu0 0.0
    %187 = vmatprep.subr.mxu0 0.0
    %188 = vmatpush2.msra.mxu0 0.0
    %189 = vmatprep.subr.mxu0 0.0
    %190 = vmatpush2.msra.mxu0 0.0
    %191 = vmatprep.subr.mxu0 0.0
    %192 = vmatpush2.msra.mxu0 0.0
    %193 = vmatprep.mubr.f32.mxu0 0.0
    %194 = vmatmul.mubr.f32.gmra.mxu0 %v127
    %v195 = vpop.f32.mrf.mxu0
    %v196 = vadd.f32 %v93, %v195
    %v197 = vpop.f32.mrf.mxu0
    %v198 = vadd.f32 %v97, %v197
    %199 = vdwg.mxu0
    %200 = vmatprep.subr.mxu0 0.0
    %201 = vmatpush1.msra.mxu0 0.0
    %202 = vmatprep.subr.mxu0 0.0
    %203 = vmatpush1.msra.mxu0 0.0
    %204 = vmatprep.subr.mxu0 0.0
    %205 = vmatpush1.msra.mxu0 0.0
    %206 = vmatprep.subr.mxu0 0.0
    %207 = vmatpush1.msra.mxu0 0.0
    %208 = vmatprep.subr.mxu0 0.0
    %209 = vmatpush1.msra.mxu0 0.0
    %210 = vmatprep.subr.mxu0 0.0
    %211 = vmatpush1.msra.mxu0 0.0
    %212 = vmatprep.subr.mxu0 0.0
    %213 = vmatpush1.msra.mxu0 0.0
    %214 = vmatprep.subr.mxu0 0.0
    %215 = vmatpush1.msra.mxu0 0.0
    %216 = vmatprep.subr.mxu0 0.0
    %217 = vmatpush1.msra.mxu0 0.0
    %218 = vmatprep.subr.mxu0 0.0
    %219 = vmatpush1.msra.mxu0 0.0
    %220 = vmatprep.subr.mxu0 0.0
    %221 = vmatpush1.msra.mxu0 0.0
    %222 = vmatprep.subr.mxu0 %v84
    %223 = vmatpush1.msra.mxu0 %v83
    %224 = vmatprep.subr.mxu0 %v77
    %225 = vmatpush1.msra.mxu0 %v76
    %226 = vmatprep.subr.mxu0 %v70
    %227 = vmatpush1.msra.mxu0 %v69
    %228 = vmatprep.subr.mxu0 %v63
    %229 = vmatpush1.msra.mxu0 %v62
    %230 = vmatprep.subr.mxu0 %v56
    %231 = vmatpush1.msra.mxu0 %v55
    %232 = vmatprep.subr.mxu0 0.0
    %233 = vmatpush2.msra.mxu0 0.0
    %234 = vmatprep.subr.mxu0 0.0
    %235 = vmatpush2.msra.mxu0 0.0
    %236 = vmatprep.subr.mxu0 0.0
    %237 = vmatpush2.msra.mxu0 0.0
    %238 = vmatprep.subr.mxu0 0.0
    %239 = vmatpush2.msra.mxu0 0.0
    %240 = vmatprep.subr.mxu0 0.0
    %241 = vmatpush2.msra.mxu0 0.0
    %242 = vmatprep.subr.mxu0 0.0
    %243 = vmatpush2.msra.mxu0 0.0
    %244 = vmatprep.subr.mxu0 0.0
    %245 = vmatpush2.msra.mxu0 0.0
    %246 = vmatprep.subr.mxu0 0.0
    %247 = vmatpush2.msra.mxu0 0.0
    %248 = vmatprep.subr.mxu0 0.0
    %249 = vmatpush2.msra.mxu0 0.0
    %250 = vmatprep.subr.mxu0 0.0
    %251 = vmatpush2.msra.mxu0 0.0
    %252 = vmatprep.subr.mxu0 0.0
    %253 = vmatpush2.msra.mxu0 0.0
    %254 = vmatprep.subr.mxu0 0.0
    %255 = vmatpush2.msra.mxu0 0.0
    %256 = vmatprep.subr.mxu0 0.0
    %257 = vmatpush2.msra.mxu0 0.0
    %258 = vmatprep.subr.mxu0 0.0
    %259 = vmatpush2.msra.mxu0 0.0
    %260 = vmatprep.subr.mxu0 0.0
    %261 = vmatpush2.msra.mxu0 0.0
    %262 = vmatprep.subr.mxu0 0.0
    %263 = vmatpush2.msra.mxu0 0.0
    %264 = vmatprep.mubr.f32.mxu0 0.0
    %265 = vmatmul.mubr.f32.gmra.mxu0 %v127
    %v266 = vpop.f32.mrf.mxu0
    %v267 = vadd.f32 %v101, %v266
    %v268 = vpop.f32.mrf.mxu0
    %v269 = vadd.f32 %v105, %v268
    %270 = vdwg.mxu0
    %271 = vmatprep.subr.mxu0 0.0
    %272 = vmatpush1.msra.mxu0 0.0
    %273 = vmatprep.subr.mxu0 0.0
    %274 = vmatpush1.msra.mxu0 0.0
    %275 = vmatprep.subr.mxu0 0.0
    %276 = vmatpush1.msra.mxu0 0.0
    %277 = vmatprep.subr.mxu0 0.0
    %278 = vmatpush1.msra.mxu0 0.0
    %279 = vmatprep.subr.mxu0 0.0
    %280 = vmatpush1.msra.mxu0 0.0
    %281 = vmatprep.subr.mxu0 0.0
    %282 = vmatpush1.msra.mxu0 0.0
    %283 = vmatprep.subr.mxu0 0.0
    %284 = vmatpush1.msra.mxu0 0.0
    %285 = vmatprep.subr.mxu0 0.0
    %286 = vmatpush1.msra.mxu0 0.0
    %287 = vmatprep.subr.mxu0 0.0
    %288 = vmatpush1.msra.mxu0 0.0
    %289 = vmatprep.subr.mxu0 0.0
    %290 = vmatpush1.msra.mxu0 0.0
    %291 = vmatprep.subr.mxu0 0.0
    %292 = vmatpush1.msra.mxu0 0.0
    %293 = vmatprep.subr.mxu0 %v86
    %294 = vmatpush1.msra.mxu0 %v85
    %295 = vmatprep.subr.mxu0 %v79
    %296 = vmatpush1.msra.mxu0 %v78
    %297 = vmatprep.subr.mxu0 %v72
    %298 = vmatpush1.msra.mxu0 %v71
    %299 = vmatprep.subr.mxu0 %v65
    %300 = vmatpush1.msra.mxu0 %v64
    %301 = vmatprep.subr.mxu0 %v58
    %302 = vmatpush1.msra.mxu0 %v57
    %303 = vmatprep.subr.mxu0 0.0
    %304 = vmatpush2.msra.mxu0 0.0
    %305 = vmatprep.subr.mxu0 0.0
    %306 = vmatpush2.msra.mxu0 0.0
    %307 = vmatprep.subr.mxu0 0.0
    %308 = vmatpush2.msra.mxu0 0.0
    %309 = vmatprep.subr.mxu0 0.0
    %310 = vmatpush2.msra.mxu0 0.0
    %311 = vmatprep.subr.mxu0 0.0
    %312 = vmatpush2.msra.mxu0 0.0
    %313 = vmatprep.subr.mxu0 0.0
    %314 = vmatpush2.msra.mxu0 0.0
    %315 = vmatprep.subr.mxu0 0.0
    %316 = vmatpush2.msra.mxu0 0.0
    %317 = vmatprep.subr.mxu0 0.0
    %318 = vmatpush2.msra.mxu0 0.0
    %319 = vmatprep.subr.mxu0 0.0
    %320 = vmatpush2.msra.mxu0 0.0
    %321 = vmatprep.subr.mxu0 0.0
    %322 = vmatpush2.msra.mxu0 0.0
    %323 = vmatprep.subr.mxu0 0.0
    %324 = vmatpush2.msra.mxu0 0.0
    %325 = vmatprep.subr.mxu0 0.0
    %326 = vmatpush2.msra.mxu0 0.0
    %327 = vmatprep.subr.mxu0 0.0
    %328 = vmatpush2.msra.mxu0 0.0
    %329 = vmatprep.subr.mxu0 0.0
    %330 = vmatpush2.msra.mxu0 0.0
    %331 = vmatprep.subr.mxu0 0.0
    %332 = vmatpush2.msra.mxu0 0.0
    %333 = vmatprep.subr.mxu0 0.0
    %334 = vmatpush2.msra.mxu0 0.0
    %335 = vmatprep.mubr.f32.mxu0 0.0
    %336 = vmatmul.mubr.f32.gmra.mxu0 %v127
    %v337 = vpop.f32.mrf.mxu0
    %v338 = vadd.f32 %v109, %v337
    %v339 = vpop.f32.mrf.mxu0
    %v340 = vadd.f32 %v113, %v339
    %341 = vdwg.mxu0
    %342 = vmatprep.subr.mxu0 0.0
    %343 = vmatpush1.msra.mxu0 0.0
    %344 = vmatprep.subr.mxu0 0.0
    %345 = vmatpush1.msra.mxu0 0.0
    %346 = vmatprep.subr.mxu0 0.0
    %347 = vmatpush1.msra.mxu0 0.0
    %348 = vmatprep.subr.mxu0 0.0
    %349 = vmatpush1.msra.mxu0 0.0
    %350 = vmatprep.subr.mxu0 0.0
    %351 = vmatpush1.msra.mxu0 0.0
    %352 = vmatprep.subr.mxu0 0.0
    %353 = vmatpush1.msra.mxu0 0.0
    %354 = vmatprep.subr.mxu0 0.0
    %355 = vmatpush1.msra.mxu0 0.0
    %356 = vmatprep.subr.mxu0 0.0
    %357 = vmatpush1.msra.mxu0 0.0
    %358 = vmatprep.subr.mxu0 0.0
    %359 = vmatpush1.msra.mxu0 0.0
    %360 = vmatprep.subr.mxu0 0.0
    %361 = vmatpush1.msra.mxu0 0.0
    %362 = vmatprep.subr.mxu0 0.0
    %363 = vmatpush1.msra.mxu0 0.0
    %364 = vmatprep.subr.mxu0 0.0
    %365 = vmatpush1.msra.mxu0 %v87
    %366 = vmatprep.subr.mxu0 0.0
    %367 = vmatpush1.msra.mxu0 %v80
    %368 = vmatprep.subr.mxu0 0.0
    %369 = vmatpush1.msra.mxu0 %v73
    %370 = vmatprep.subr.mxu0 0.0
    %371 = vmatpush1.msra.mxu0 %v66
    %372 = vmatprep.subr.mxu0 0.0
    %373 = vmatpush1.msra.mxu0 %v59
    %374 = vmatprep.subr.mxu0 0.0
    %375 = vmatpush2.msra.mxu0 0.0
    %376 = vmatprep.subr.mxu0 0.0
    %377 = vmatpush2.msra.mxu0 0.0
    %378 = vmatprep.subr.mxu0 0.0
    %379 = vmatpush2.msra.mxu0 0.0
    %380 = vmatprep.subr.mxu0 0.0
    %381 = vmatpush2.msra.mxu0 0.0
    %382 = vmatprep.subr.mxu0 0.0
    %383 = vmatpush2.msra.mxu0 0.0
    %384 = vmatprep.subr.mxu0 0.0
    %385 = vmatpush2.msra.mxu0 0.0
    %386 = vmatprep.subr.mxu0 0.0
    %387 = vmatpush2.msra.mxu0 0.0
    %388 = vmatprep.subr.mxu0 0.0
    %389 = vmatpush2.msra.mxu0 0.0
    %390 = vmatprep.subr.mxu0 0.0
    %391 = vmatpush2.msra.mxu0 0.0
    %392 = vmatprep.subr.mxu0 0.0
    %393 = vmatpush2.msra.mxu0 0.0
    %394 = vmatprep.subr.mxu0 0.0
    %395 = vmatpush2.msra.mxu0 0.0
    %396 = vmatprep.subr.mxu0 0.0
    %397 = vmatpush2.msra.mxu0 0.0
    %398 = vmatprep.subr.mxu0 0.0
    %399 = vmatpush2.msra.mxu0 0.0
    %400 = vmatprep.subr.mxu0 0.0
    %401 = vmatpush2.msra.mxu0 0.0
    %402 = vmatprep.subr.mxu0 0.0
    %403 = vmatpush2.msra.mxu0 0.0
    %404 = vmatprep.subr.mxu0 0.0
    %405 = vmatpush2.msra.mxu0 0.0
    %406 = vmatprep.mubr.f32.mxu0 0.0
    %407 = vmatmul.mubr.f32.gmra.mxu0 %v127
    %v408 = vpop.f32.mrf.mxu0
    %v409 = vadd.f32 %v117, %v408
    %v410 = vpop.f32.mrf.mxu0
    %411 = vdwg.mxu0
    %v412 = vxor.u32 %v269, 2147483648
    %v413 = vxor.u32 %v338, 2147483648
    %v414 = vxor.u32 %v340, 2147483648
    %v415 = vxor.u32 %v409, 2147483648
    %v416 = vmul.f32 %v412, 1.442695
    %v417 = vpow.pop %v416
    %v418 = vmul.f32 %v413, 1.442695
    %v419 = vpow.pop %v418
    %v420 = vmul.f32 %v414, 1.442695
    %v421 = vpow.pop %v420
    %v422 = vmul.f32 %v415, 1.442695
    %v423 = vpow.pop %v422
    %v424 = vadd.f32 %v417, 1.0
    %v425 = vadd.f32 %v419, 1.0
    %v426 = vadd.f32 %v421, 1.0
    %v427 = vadd.f32 %v423, 1.0
    %v428 = vrcp.pop %v424
    %v429 = vmul.f32 1.0, %v428
    %v430 = vrcp.pop %v425
    %v431 = vmul.f32 1.0, %v430
    %v432 = vrcp.pop %v426
    %v433 = vmul.f32 1.0, %v432
    %v434 = vrcp.pop %v427
    %v435 = vmul.f32 1.0, %v434
    %440 = vrot.lane.b32.xlu0 %v429, 64
    %v441 = vpop.permute.xlu0 %440
    %442 = vrot.lane.b32.xlu0 %v431, 64
    %v443 = vpop.permute.xlu0 %442
    %444 = vrot.lane.b32.xlu0 %v433, 64
    %v445 = vpop.permute.xlu0 %444
    %446 = vrot.lane.b32.xlu0 %v435, 64
    %v447 = vpop.permute.xlu0 %446
    %vm448 = vcmask 523264
    %v449 = vsel %vm448, %v441, %v443
    %v450 = vsel %vm448, %v443, %v445
    %v451 = vsel %vm448, %v445, %v447
    %v456 = vmul.f32 %v196, %v449
    %v457 = vmul.f32 %v198, %v450
    %v458 = vmul.f32 %v267, %v451
    %v459 = vmul.f32 %v269, %v447
    %460 = vst [vmem:[#allocation8] sm:$0xff] %v456
    %461 = vst [vmem:[#allocation8 + $0x8] sm:$0xff] %v457
    %462 = vst [vmem:[#allocation8 + $0x10] sm:$0xff] %v458
    %463 = vst.msk [vmem:[#allocation8 + $0x18] sm:$0xff] %vm448, %v459
    // Predicated region
    $region26: #{tpu_custom_call.1} parent=1 // pred_check
      _
    $region27: #{tpu_custom_call.1} parent=1 // pred_check_branch
      %465 = sbr.rel (0) target = $region29
    $region28: #{tpu_custom_call.1} parent=1 // pred_region
      %s467 = ssub.s32 512, 512
      %468 = vsyncadd [#allocation4], %s467
      %s470 = sshll.u32 [#allocation8], 4
      %s471 = int_to_ptr.vmem [resolvable:$true] %s470
      %473 = dma.vmem_to_hbm [thread:$0]  %s471, 512, %s3, [#allocation4]
    $region29: #{tpu_custom_call.1} parent=1 // pred_fallthru
      _
    // Predicated region
    $region30: #{tpu_custom_call.1} parent=1 // pred_check
      _
    $region31: #{tpu_custom_call.1} parent=1 // pred_check_branch
      %475 = sbr.rel (0) target = $region33
    $region32: #{tpu_custom_call.1} parent=1 // pred_region
      %476 = dma.done [#allocation4], 512
    $region33: #{tpu_custom_call.1} parent=1 // pred_fallthru
      _
    %477 = vsyncpa [#allocation3], 1
    %478 = vsyncpa [#allocation6], 1
    %479 = vsyncpa [#allocation4], 1

</llo_original>
